<compile_context>
chip_gen: v6e
topology: v6e:2x2x1
jax: 0.10.0
libtpu: 0.0.40
codegen_flags: <defaults>
</compile_context>

<pallas_src>
import jax
import jax.numpy as jnp
from jax.experimental import pallas as pl
from jax.experimental.pallas import tpu as pltpu


def normalize_kernel(scale_ref, bias_ref, x_ref, o_ref):
    # scale/bias are either (TR, 1) per-row params (broadcast over lanes) or
    # (1, TC) per-column params (broadcast over sublanes); jnp broadcasting
    # handles both with the same body: a single VPU multiply-add.
    y = x_ref[...] * scale_ref[...] + bias_ref[...]
    o_ref[...] = y.astype(o_ref.dtype)


def _choose_tiles(R, L, itemsize, target_bytes):
    """Pick (TR, TC): biggest lane-dense tile within `target_bytes`/operand.

    Never exceeds the budget (fixes the earlier 8x overshoot when the row
    count needed to hit the budget was < one sublane pack)."""
    pack = max(8, 32 // itemsize)          # sublane packing: 8 f32, 16 bf16, 32 i8
    if L * itemsize <= target_bytes:
        tc = L                             # full lane axis (always legal)
        tr = target_bytes // (tc * itemsize)
        if tr >= R:
            return R, tc                   # whole slab in one tile
        if tr >= pack:
            return (tr // pack) * pack, tc # row-tiled, pack-aligned
        # tr would be < pack: keep tr = pack and shrink the column tile
        # instead so the per-operand budget is respected (no 8x blow-up).
    tr = pack if R >= pack else R
    tc = (target_bytes // (tr * itemsize) // 128) * 128
    tc = max(128, min(tc, L))
    return tr, tc


def normalize(x, mean, std, *, donate_input=False):
    """(x - mean) / std with per-channel mean/std, x in NCHW."""
    N, C, H, W = x.shape
    assert mean.shape == (C,) and std.shape == (C,)
    itemsize = jnp.dtype(x.dtype).itemsize
    spatial = H * W

    # Native bf16 compute on bf16 inputs (v6e/v7x VPUs are bf16-native and the
    # op is HBM-bound anyway); f32 compute otherwise.
    compute_dtype = jnp.bfloat16 if x.dtype == jnp.bfloat16 else jnp.float32
    inv_std = 1.0 / std.astype(jnp.float32)
    scale_c = inv_std.astype(compute_dtype)                                  # (C,)
    bias_c = ((-mean.astype(jnp.float32)) * inv_std).astype(compute_dtype)   # (C,)

    if spatial >= 128:
        # One row per (n, c) image; H*W contiguous on the lanes.
        R, L = N * C, spatial
        x2 = x.reshape(R, L)
        scale = jnp.tile(scale_c, N).reshape(R, 1)
        bias = jnp.tile(bias_c, N).reshape(R, 1)
        params_per_row = True
    else:
        # Small spatial maps: keep the lane axis dense by putting C*H*W on the
        # lanes; params become a (1, C*H*W) row broadcast over the N rows.
        R, L = N, C * spatial
        x2 = x.reshape(R, L)
        scale = jnp.repeat(scale_c, spatial).reshape(1, L)
        bias = jnp.repeat(bias_c, spatial).reshape(1, L)
        params_per_row = False

    # 4 MiB per operand -> 2 operands x 2 pipeline buffers = 16 MiB, which sits
    # comfortably under the explicit 32 MiB limit below on every generation
    # (incl. v7x's 64 MiB physical VMEM).
    TARGET_TILE_BYTES = 4 << 20
    tr, tc = _choose_tiles(R, L, itemsize, TARGET_TILE_BYTES)

    # Guarantee >= 2 grid steps along a parallel axis when there is real work,
    # so v7x's two TensorCores both get tiles (near-2x for medium inputs).
    if pl.cdiv(R, tr) * pl.cdiv(L, tc) < 2 and R * L * itemsize > (2 << 20):
        pack = max(8, 32 // itemsize)
        if tr > pack:
            tr = max(pack, (((tr + 1) // 2) // pack) * pack)
        elif tc > 128:
            tc = max(128, (((tc + 1) // 2) // 128) * 128)

    grid = (pl.cdiv(R, tr), pl.cdiv(L, tc))

    if params_per_row:
        scale_spec = pl.BlockSpec((tr, 1), lambda i, j: (i, 0))
        bias_spec = pl.BlockSpec((tr, 1), lambda i, j: (i, 0))
    else:
        scale_spec = pl.BlockSpec((1, tc), lambda i, j: (0, j))
        bias_spec = pl.BlockSpec((1, tc), lambda i, j: (0, j))

    param_bytes = (scale.size + bias.size) * jnp.dtype(compute_dtype).itemsize
    cost = pl.CostEstimate(
        flops=2 * R * L,
        transcendentals=0,
        bytes_accessed=2 * R * L * itemsize + param_bytes,
    )

    kwargs = {}
    if donate_input:
        # x2 is input index 2; aliasing avoids a second R*L HBM allocation
        # when the caller can donate x.
        kwargs["input_output_aliases"] = {2: 0}

    out2 = pl.pallas_call(
        normalize_kernel,
        out_shape=jax.ShapeDtypeStruct((R, L), x.dtype),
        grid=grid,
        in_specs=[scale_spec, bias_spec,
                  pl.BlockSpec((tr, tc), lambda i, j: (i, j))],
        out_specs=pl.BlockSpec((tr, tc), lambda i, j: (i, j)),
        compiler_params=pltpu.CompilerParams(
            dimension_semantics=("parallel", "parallel"),
            vmem_limit_bytes=32 * 1024 * 1024,
        ),
        cost_estimate=cost,
        **kwargs,
    )(scale, bias, x2)

    return out2.reshape(N, C, H, W)


if __name__ == "__main__":
    N, C, H, W = 2, 4, 16, 16

    key = jax.random.PRNGKey(0)
    x = jax.random.normal(key, (N, C, H, W), dtype=jnp.float32)

    # Deterministic per-channel normalization buffers (synthetic, not loaded).
    mean = jnp.arange(C, dtype=jnp.float32) * 0.1          # [0.0, 0.1, 0.2, 0.3]
    std = 0.5 + jnp.arange(C, dtype=jnp.float32) * 0.25    # [0.5, 0.75, 1.0, 1.25]

    out = normalize(x, mean, std)
    out = jax.block_until_ready(out)

    # Reference check (plain JAX, mirrors PyTorch broadcasting of (C,1,1) buffers).
    ref = (x - mean[None, :, None, None]) / std[None, :, None, None]
    assert out.shape == x.shape and out.dtype == x.dtype
    # scale/bias folding (mul-add) may differ from the divide by a ULP or two.
    assert jnp.allclose(out, ref, atol=1e-5, rtol=1e-5)

    print("KERNEL_OK")
</pallas_src>

<mosaic_0001>
module attributes {stable_mosaic.version = 11 : i64} {
  func.func @normalize_kernel(%arg0: i32, %arg1: i32, %arg2: memref<8x1xf32, #tpu.memory_space<vmem>>, %arg3: memref<8x1xf32, #tpu.memory_space<vmem>>, %arg4: memref<8x256xf32, #tpu.memory_space<vmem>>, %arg5: memref<8x256xf32, #tpu.memory_space<vmem>>) attributes {dimension_semantics = [#tpu.dimension_semantics<parallel>, #tpu.dimension_semantics<parallel>], iteration_bounds = array<i64: 1, 1>, scalar_prefetch = 0 : i64, scratch_operands = 0 : i64, tpu.core_type = #tpu.core_type<tc>, window_params = [{transform_indices = @transform_0, window_bounds = array<i64: 8, 1>}, {transform_indices = @transform_1, window_bounds = array<i64: 8, 1>}, {transform_indices = @transform_2, window_bounds = array<i64: 8, 256>}, {transform_indices = @transform_3, window_bounds = array<i64: 8, 256>}]} {
    %c0 = arith.constant 0 : index
    %c0_0 = arith.constant 0 : index
    %0 = vector.load %arg4[%c0, %c0_0] : memref<8x256xf32, #tpu.memory_space<vmem>>, vector<8x256xf32>
    %c0_1 = arith.constant 0 : index
    %c0_2 = arith.constant 0 : index
    %1 = vector.load %arg2[%c0_1, %c0_2] : memref<8x1xf32, #tpu.memory_space<vmem>>, vector<8x1xf32>
    %2 = vector.broadcast %1 : vector<8x1xf32> to vector<8x256xf32>
    %3 = arith.mulf %0, %2 : vector<8x256xf32>
    %c0_3 = arith.constant 0 : index
    %c0_4 = arith.constant 0 : index
    %4 = vector.load %arg3[%c0_3, %c0_4] : memref<8x1xf32, #tpu.memory_space<vmem>>, vector<8x1xf32>
    %5 = vector.broadcast %4 : vector<8x1xf32> to vector<8x256xf32>
    %6 = arith.addf %3, %5 : vector<8x256xf32>
    %c0_5 = arith.constant 0 : index
    %c0_6 = arith.constant 0 : index
    %7 = vector.load %arg5[%c0_5, %c0_6] : memref<8x256xf32, #tpu.memory_space<vmem>>, vector<8x256xf32>
    tpu.vector_store %arg5[%c0_5, %c0_6], %6 {strides = array<i32>} : memref<8x256xf32, #tpu.memory_space<vmem>>, vector<8x256xf32>,
    return
  }
  func.func @transform_0(%arg0: i32, %arg1: i32) -> (i32, i32) {
    %c0_i32 = arith.constant 0 : i32
    %c0_i32_0 = arith.constant 0 : i32
    return %arg0, %c0_i32 : i32, i32
  }
  func.func @transform_1(%arg0: i32, %arg1: i32) -> (i32, i32) {
    %c0_i32 = arith.constant 0 : i32
    %c0_i32_0 = arith.constant 0 : i32
    return %arg0, %c0_i32 : i32, i32
  }
  func.func @transform_2(%arg0: i32, %arg1: i32) -> (i32, i32) {
    %c0_i32 = arith.constant 0 : i32
    return %arg0, %arg1 : i32, i32
  }
  func.func @transform_3(%arg0: i32, %arg1: i32) -> (i32, i32) {
    %c0_i32 = arith.constant 0 : i32
    return %arg0, %arg1 : i32, i32
  }
}

</mosaic_0001>

<llo_original>
// kernel: tpu_custom_call.1
$region0: #{tpu_custom_call.1}
  #allocation0 [shape = 'u32[]', space=smem, size = 0x4, offset = 0x4, fixed_abs, tag = 'smem constant byte address 0x4 - core index']
  #allocation1 [shape = 'u32[144,128]{1,0:T(1,128)}', space=vmem, size = 0x12000, scoped, tag = 'internal scratch']
  %s0 = inlined_call_operand.vmem [shape: f32[8,1], index: 0, kind: input, shape index: {}]
  %s1 = inlined_call_operand.vmem [shape: f32[8,1], index: 1, kind: input, shape index: {}]
  %s2 = inlined_call_operand.vmem [shape: f32[8,256], index: 2, kind: input, shape index: {}]
  %s3 = inlined_call_operand.hbm [shape: f32[8,256], index: 3, kind: output, shape index: {}]
  %s4 = sld [smem:[#allocation0]]
  $region22: #{tpu_custom_call.1} parent=0
    _
  %s6 = ssub.s32 1, %s4
  %s7 = scalar_select 0, %s6, %s4
  $region1: #{tpu_custom_call.1} parent=0
    #allocation2 [shape = 'u8[8192]{0}', space=vmem, size = 0x2000, scoped, tag = 'output window, operand 0, single buffered']
    #allocation3 [shape = 's32[1]{0}', space=sflag, size = 0x4, scoped, tag = 'scoped memory for tpu_custom_call.1']
    %8 = vsyncpa [#allocation3], 0
    // Predicated region
    $region2: #{tpu_custom_call.1} parent=1 // pred_check
      _
    $region3: #{tpu_custom_call.1} parent=1 // pred_check_branch
      %10 = sbr.rel (0) target = $region5
    $region4: #{tpu_custom_call.1} parent=1 // pred_region
      _
    $region5: #{tpu_custom_call.1} parent=1 // pred_fallthru
      _
    // Predicated region
    $region6: #{tpu_custom_call.1} parent=1 // pred_check
      _
    $region7: #{tpu_custom_call.1} parent=1 // pred_check_branch
      %12 = sbr.rel (0) target = $region9
    $region8: #{tpu_custom_call.1} parent=1 // pred_region
      _
    $region9: #{tpu_custom_call.1} parent=1 // pred_fallthru
      _
    // Predicated region
    $region10: #{tpu_custom_call.1} parent=1 // pred_check
      _
    $region11: #{tpu_custom_call.1} parent=1 // pred_check_branch
      %14 = sbr.rel (0) target = $region13
    $region12: #{tpu_custom_call.1} parent=1 // pred_region
      _
    $region13: #{tpu_custom_call.1} parent=1 // pred_fallthru
      _
    %v15 = vld [vmem:[%s2] sm:$0xff]
    %v16 = vld [vmem:[%s2 + $0x8] sm:$0xff]
    %v17 = vld [vmem:[%s0] sm:$0xff]
    %19 = vset.pattern.permute.xlu0 0
    %20 = vperm.xlu0 %19, %v17
    %v21 = vpop.permute.xlu0 %20
    %v23 = vmul.f32 %v15, %v21
    %v24 = vmul.f32 %v16, %v21
    %v25 = vld [vmem:[%s1] sm:$0xff]
    %27 = vset.pattern.permute.xlu0 0
    %28 = vperm.xlu0 %27, %v25
    %v29 = vpop.permute.xlu0 %28
    %v31 = vadd.f32 %v23, %v29
    %v32 = vadd.f32 %v24, %v29
    %33 = vst [vmem:[#allocation2] sm:$0xff] %v31
    %34 = vst [vmem:[#allocation2 + $0x8] sm:$0xff] %v32
    // Predicated region
    $region14: #{tpu_custom_call.1} parent=1 // pred_check
      _
    $region15: #{tpu_custom_call.1} parent=1 // pred_check_branch
      %36 = sbr.rel (0) target = $region17
    $region16: #{tpu_custom_call.1} parent=1 // pred_region
      %s38 = ssub.s32 256, 256
      %39 = vsyncadd [#allocation3], %s38
      %s41 = sshll.u32 [#allocation2], 4
      %s42 = int_to_ptr.vmem [resolvable:$true] %s41
      %44 = dma.vmem_to_hbm [thread:$0]  %s42, 256, %s3, [#allocation3]
    $region17: #{tpu_custom_call.1} parent=1 // pred_fallthru
      _
    // Predicated region
    $region18: #{tpu_custom_call.1} parent=1 // pred_check
      _
    $region19: #{tpu_custom_call.1} parent=1 // pred_check_branch
      %46 = sbr.rel (0) target = $region21
    $region20: #{tpu_custom_call.1} parent=1 // pred_region
      %47 = dma.done [#allocation3], 256
    $region21: #{tpu_custom_call.1} parent=1 // pred_fallthru
      _
    %48 = vsyncpa [#allocation3], 1

</llo_original>
